<compile_context>
chip_gen: v6e
topology: v6e:2x2x1
jax: 0.10.0
libtpu: 0.0.40
codegen_flags: <defaults>
</compile_context>

<pallas_src>
import functools

import jax
import jax.numpy as jnp
from jax.experimental import pallas as pl
from jax.experimental.pallas import tpu as pltpu


# ----------------------------------------------------------------------------
# Host-side (one-time) parameter preparation
# ----------------------------------------------------------------------------
def _fold_params(params):
    """Fold the activation-free l1 into l2.  params: 6 x (W [out,in], b [out])."""
    (w1, b1), (w2, b2) = params[0], params[1]
    w12 = w2 @ w1          # [32, 13]
    b12 = w2 @ b1 + b2     # [32]
    return [(w12, b12)] + list(params[2:])


def _pack_params(folded, dtype):
    """Pack all W into one [rows, 128] array (dtype) and all biases into a
    separate f32 [rows, 1] array.

    Layer i: W at [r : r+out, 0 : fin], bias at [r : r+out, 0] of the bias
    array.  Row offsets and contraction dims are rounded up to 16 so every
    bf16 slice is vreg-aligned (the layer-0 K of 13 is zero-padded to 16).

    Returns (packed_w, biases_f32, layout, fin0_padded) with
    layout = tuple of (row_offset, out, fin_padded).
    """
    layout = []
    r = 0
    for (w, _) in folded:
        out, fin = w.shape
        fin_p = ((fin + 15) // 16) * 16
        layout.append((r, out, fin_p))
        r = ((r + out + 15) // 16) * 16
    rows = max(r, 16)

    packed = jnp.zeros((rows, 128), jnp.float32)
    biases = jnp.zeros((rows, 1), jnp.float32)
    for (w, b), (r0, out, _) in zip(folded, layout):
        fin = w.shape[1]
        packed = packed.at[r0:r0 + out, 0:fin].set(w)       # zero-padded K cols
        biases = biases.at[r0:r0 + out, 0].set(b)           # biases stay f32
    return packed.astype(dtype), biases, tuple(layout), layout[0][2]


# ----------------------------------------------------------------------------
# Kernel
# ----------------------------------------------------------------------------
def _mlp_kernel(x_ref, w_ref, b_ref, o_ref, *, layout, n_sub, sub, compute_dtype):
    # x_ref: [Fp, tb]   f32 activations (features on sublanes, batch on lanes)
    # w_ref: [rows,128] packed weights (bf16), resident: one DMA, constant index
    # b_ref: [rows, 1]  f32 biases, resident
    # o_ref: [1, tb]    lane-dense f32 output
    #
    # Split the batch tile into n_sub independent 256-lane chains; their layer
    # chains interleave so the MXU push/drain latency of the tiny strictly
    # dependent matmuls overlaps.  Cast f32->bf16 in-kernel (free VPU slot).
    hs = [x_ref[:, j * sub:(j + 1) * sub].astype(compute_dtype)
          for j in range(n_sub)]
    last = len(layout) - 1
    for li, (r, out, fin) in enumerate(layout):
        w = w_ref[r:r + out, 0:fin]          # [out, fin]  (bf16, vreg-aligned)
        b = b_ref[r:r + out, :]              # [out, 1]    (f32, no rounding)
        new_hs = []
        for h in hs:
            a = jnp.dot(w, h, preferred_element_type=jnp.float32) + b
            a = jnp.maximum(a, 0.0)          # ReLU after every folded layer
            new_hs.append(a if li == last else a.astype(compute_dtype))
        hs = new_hs
    for j in range(n_sub):
        o_ref[:, j * sub:(j + 1) * sub] = hs[j].astype(o_ref.dtype)


# ----------------------------------------------------------------------------
# Wrapper factory: pack once, return a jitted per-call forward
# ----------------------------------------------------------------------------
def make_mlp_forward(params, *, sub=256, n_sub=2, use_bf16=True):
    """params: 6 x (W [out,in], b [out]) in PyTorch-native layout.
    Returns forward(x: [B, 13] f32) -> [B, output_size] f32 (jitted)."""
    assert sub % 128 == 0, "sub-tiles must be 128-lane aligned"
    dtype = jnp.bfloat16 if use_bf16 else jnp.float32
    folded = _fold_params(params)
    packed_w, biases, layout, fin0_p = _pack_params(folded, dtype)
    out_size = folded[-1][0].shape[0]
    tb = sub * n_sub                         # 512 -> grid=(1,) for B<=512

    kernel = functools.partial(_mlp_kernel, layout=layout, n_sub=n_sub,
                               sub=sub, compute_dtype=dtype)

    @jax.jit
    def forward(x):
        B, F = x.shape
        bp = ((B + tb - 1) // tb) * tb
        # Batch on the lane axis; pad features 13->16 (K alignment) and the
        # batch up to the tile.  Stays f32 -- the bf16 cast happens in-kernel.
        x_t = jnp.pad(x.T, ((0, fin0_p - F), (0, bp - B)))

        flops = sum((2 * fin + 2) * out for (_, out, fin) in layout) * bp
        bytes_accessed = (x_t.size * 4
                          + packed_w.size * packed_w.dtype.itemsize
                          + biases.size * 4
                          + out_size * bp * 4)

        out = pl.pallas_call(
            kernel,
            out_shape=jax.ShapeDtypeStruct((out_size, bp), jnp.float32),
            grid_spec=pltpu.PrefetchScalarGridSpec(
                num_scalar_prefetch=0,
                grid=(bp // tb,),                              # =1 for B<=512
                in_specs=[
                    pl.BlockSpec((fin0_p, tb), lambda i: (0, i)),   # activations
                    pl.BlockSpec(packed_w.shape, lambda i: (0, 0)),  # weights: resident
                    pl.BlockSpec(biases.shape, lambda i: (0, 0)),    # f32 biases: resident
                ],
                out_specs=pl.BlockSpec((out_size, tb), lambda i: (0, i)),  # lane-dense
            ),
            compiler_params=pltpu.CompilerParams(
                dimension_semantics=("parallel",)),   # only matters if grid > 1
            cost_estimate=pl.CostEstimate(
                flops=flops, transcendentals=0, bytes_accessed=bytes_accessed),
        )(x_t, packed_w, biases)

        return out[:, :B].T                           # [B, out_size]

    return forward


# ----------------------------------------------------------------------------
# References & init
# ----------------------------------------------------------------------------
def init_linear(key, fan_in, fan_out):
    """torch.nn.Linear default init: W [out,in], b [out] ~ U(-1/sqrt(in), 1/sqrt(in))."""
    kw, kb = jax.random.split(key)
    bound = 1.0 / jnp.sqrt(jnp.float32(fan_in))
    w = jax.random.uniform(kw, (fan_out, fan_in), jnp.float32, -bound, bound)
    b = jax.random.uniform(kb, (fan_out,), jnp.float32, -bound, bound)
    return w, b


def reference_forward_f32(x, params):
    """Pure-f32 equivalent of the PyTorch forward (PyTorch [out,in] weights)."""
    w1, b1 = params[0]
    h = x @ w1.T + b1
    for (w, b) in params[1:]:
        h = jnp.maximum(h @ w.T + b, 0.0)
    return h


def reference_forward_packed(x, folded, dtype=jnp.bfloat16):
    """Same math path as the kernel: folded l1->l2, bf16 weights/activations,
    f32 biases and f32 accumulation."""
    h = x.T.astype(dtype)
    n = len(folded)
    for i, (w, b) in enumerate(folded):
        a = jnp.dot(w.astype(dtype), h, preferred_element_type=jnp.float32) \
            + b[:, None]
        a = jnp.maximum(a, 0.0)
        h = a if i == n - 1 else a.astype(dtype)
    return h.T


# ----------------------------------------------------------------------------
if __name__ == "__main__":
    input_size = 13    # Boston housing features
    output_size = 1
    B = 512            # one grid step (tb = 512) -> no per-step overhead

    key = jax.random.PRNGKey(0)
    keys = jax.random.split(key, 7)
    sizes = [(input_size, 32), (32, 32), (32, 16), (16, 16), (16, 16),
             (16, output_size)]
    params = [init_linear(k, fi, fo) for k, (fi, fo) in zip(keys[:6], sizes)]

    x = jax.random.normal(keys[6], (B, input_size), jnp.float32)

    forward = make_mlp_forward(params, sub=256, n_sub=2, use_bf16=True)
    out = jax.block_until_ready(forward(x))
    assert out.shape == (B, output_size)

    # Tight check against a reference following the exact kernel math path
    # (folded l1->l2, bf16 weights/activations, f32 biases + accumulation).
    ref_packed = reference_forward_packed(x, _fold_params(params))
    assert jnp.allclose(out, ref_packed, atol=2e-4, rtol=2e-4), \
        float(jnp.max(jnp.abs(out - ref_packed)))

    # Loose check against the pure-f32 PyTorch-equivalent forward; bf16
    # operands introduce ~0.3%/layer rounding, so tolerance is relaxed.
    ref_f32 = reference_forward_f32(x, params)
    assert jnp.allclose(out, ref_f32, atol=5e-2, rtol=5e-2), \
        float(jnp.max(jnp.abs(out - ref_f32)))

    print("KERNEL_OK")
</pallas_src>

<mosaic_0001>
module attributes {stable_mosaic.version = 11 : i64} {
  func.func @_mlp_kernel(%arg0: i32, %arg1: memref<16x512xf32, #tpu.memory_space<vmem>>, %arg2: memref<96x128xbf16, #tpu.memory_space<vmem>>, %arg3: memref<96x1xf32, #tpu.memory_space<vmem>>, %arg4: memref<1x512xf32, #tpu.memory_space<vmem>>) attributes {dimension_semantics = [#tpu.dimension_semantics<parallel>], iteration_bounds = array<i64: 1>, scalar_prefetch = 0 : i64, scratch_operands = 0 : i64, tpu.core_type = #tpu.core_type<tc>, window_params = [{transform_indices = @transform_0, window_bounds = array<i64: 16, 512>}, {pipeline_mode = #tpu.pipeline_mode<synchronous>, transform_indices = @transform_1, window_bounds = array<i64: 96, 128>}, {pipeline_mode = #tpu.pipeline_mode<synchronous>, transform_indices = @transform_2, window_bounds = array<i64: 96, 1>}, {transform_indices = @transform_3, window_bounds = array<i64: 1, 512>}]} {
    %c0 = arith.constant 0 : index
    %c0_0 = arith.constant 0 : index
    %0 = vector.load %arg1[%c0, %c0_0] : memref<16x512xf32, #tpu.memory_space<vmem>>, vector<16x256xf32>
    %1 = arith.truncf %0 : vector<16x256xf32> to vector<16x256xbf16>
    %c0_1 = arith.constant 0 : index
    %c256 = arith.constant 256 : index
    %2 = vector.load %arg1[%c0_1, %c256] : memref<16x512xf32, #tpu.memory_space<vmem>>, vector<16x256xf32>
    %3 = arith.truncf %2 : vector<16x256xf32> to vector<16x256xbf16>
    %c0_2 = arith.constant 0 : index
    %c0_3 = arith.constant 0 : index
    %4 = vector.load %arg2[%c0_2, %c0_3] : memref<96x128xbf16, #tpu.memory_space<vmem>>, vector<32x16xbf16>
    %c0_4 = arith.constant 0 : index
    %c0_5 = arith.constant 0 : index
    %5 = vector.load %arg3[%c0_4, %c0_5] : memref<96x1xf32, #tpu.memory_space<vmem>>, vector<32x1xf32>
    %cst = arith.constant dense<0.000000e+00> : vector<32x256xf32>
    %6 = tpu.matmul %4, %1, %cst {dimension_numbers = #tpu.dot_dimension_numbers<[1], [0], [0], [1], [0, 0, 1, 1], [], []>} : vector<32x16xbf16>, vector<16x256xbf16>, vector<32x256xf32> -> vector<32x256xf32>
    %7 = vector.broadcast %5 : vector<32x1xf32> to vector<32x256xf32>
    %8 = arith.addf %6, %7 : vector<32x256xf32>
    %cst_6 = arith.constant 0.000000e+00 : f32
    %9 = vector.broadcast %cst_6 : f32 to vector<32x256xf32>
    %10 = arith.maximumf %8, %9 : vector<32x256xf32>
    %11 = arith.truncf %10 : vector<32x256xf32> to vector<32x256xbf16>
    %cst_7 = arith.constant dense<0.000000e+00> : vector<32x256xf32>
    %12 = tpu.matmul %4, %3, %cst_7 {dimension_numbers = #tpu.dot_dimension_numbers<[1], [0], [0], [1], [0, 0, 1, 1], [], []>} : vector<32x16xbf16>, vector<16x256xbf16>, vector<32x256xf32> -> vector<32x256xf32>
    %13 = vector.broadcast %5 : vector<32x1xf32> to vector<32x256xf32>
    %14 = arith.addf %12, %13 : vector<32x256xf32>
    %cst_8 = arith.constant 0.000000e+00 : f32
    %15 = vector.broadcast %cst_8 : f32 to vector<32x256xf32>
    %16 = arith.maximumf %14, %15 : vector<32x256xf32>
    %17 = arith.truncf %16 : vector<32x256xf32> to vector<32x256xbf16>
    %c32 = arith.constant 32 : index
    %c0_9 = arith.constant 0 : index
    %18 = vector.load %arg2[%c32, %c0_9] : memref<96x128xbf16, #tpu.memory_space<vmem>>, vector<16x32xbf16>
    %c32_10 = arith.constant 32 : index
    %c0_11 = arith.constant 0 : index
    %19 = vector.load %arg3[%c32_10, %c0_11] : memref<96x1xf32, #tpu.memory_space<vmem>>, vector<16x1xf32>
    %cst_12 = arith.constant dense<0.000000e+00> : vector<16x256xf32>
    %20 = tpu.matmul %18, %11, %cst_12 {dimension_numbers = #tpu.dot_dimension_numbers<[1], [0], [0], [1], [0, 0, 1, 1], [], []>} : vector<16x32xbf16>, vector<32x256xbf16>, vector<16x256xf32> -> vector<16x256xf32>
    %21 = vector.broadcast %19 : vector<16x1xf32> to vector<16x256xf32>
    %22 = arith.addf %20, %21 : vector<16x256xf32>
    %cst_13 = arith.constant 0.000000e+00 : f32
    %23 = vector.broadcast %cst_13 : f32 to vector<16x256xf32>
    %24 = arith.maximumf %22, %23 : vector<16x256xf32>
    %25 = arith.truncf %24 : vector<16x256xf32> to vector<16x256xbf16>
    %cst_14 = arith.constant dense<0.000000e+00> : vector<16x256xf32>
    %26 = tpu.matmul %18, %17, %cst_14 {dimension_numbers = #tpu.dot_dimension_numbers<[1], [0], [0], [1], [0, 0, 1, 1], [], []>} : vector<16x32xbf16>, vector<32x256xbf16>, vector<16x256xf32> -> vector<16x256xf32>
    %27 = vector.broadcast %19 : vector<16x1xf32> to vector<16x256xf32>
    %28 = arith.addf %26, %27 : vector<16x256xf32>
    %cst_15 = arith.constant 0.000000e+00 : f32
    %29 = vector.broadcast %cst_15 : f32 to vector<16x256xf32>
    %30 = arith.maximumf %28, %29 : vector<16x256xf32>
    %31 = arith.truncf %30 : vector<16x256xf32> to vector<16x256xbf16>
    %c48 = arith.constant 48 : index
    %c0_16 = arith.constant 0 : index
    %32 = vector.load %arg2[%c48, %c0_16] : memref<96x128xbf16, #tpu.memory_space<vmem>>, vector<16x16xbf16>
    %c48_17 = arith.constant 48 : index
    %c0_18 = arith.constant 0 : index
    %33 = vector.load %arg3[%c48_17, %c0_18] : memref<96x1xf32, #tpu.memory_space<vmem>>, vector<16x1xf32>
    %cst_19 = arith.constant dense<0.000000e+00> : vector<16x256xf32>
    %34 = tpu.matmul %32, %25, %cst_19 {dimension_numbers = #tpu.dot_dimension_numbers<[1], [0], [0], [1], [0, 0, 1, 1], [], []>} : vector<16x16xbf16>, vector<16x256xbf16>, vector<16x256xf32> -> vector<16x256xf32>
    %35 = vector.broadcast %33 : vector<16x1xf32> to vector<16x256xf32>
    %36 = arith.addf %34, %35 : vector<16x256xf32>
    %cst_20 = arith.constant 0.000000e+00 : f32
    %37 = vector.broadcast %cst_20 : f32 to vector<16x256xf32>
    %38 = arith.maximumf %36, %37 : vector<16x256xf32>
    %39 = arith.truncf %38 : vector<16x256xf32> to vector<16x256xbf16>
    %cst_21 = arith.constant dense<0.000000e+00> : vector<16x256xf32>
    %40 = tpu.matmul %32, %31, %cst_21 {dimension_numbers = #tpu.dot_dimension_numbers<[1], [0], [0], [1], [0, 0, 1, 1], [], []>} : vector<16x16xbf16>, vector<16x256xbf16>, vector<16x256xf32> -> vector<16x256xf32>
    %41 = vector.broadcast %33 : vector<16x1xf32> to vector<16x256xf32>
    %42 = arith.addf %40, %41 : vector<16x256xf32>
    %cst_22 = arith.constant 0.000000e+00 : f32
    %43 = vector.broadcast %cst_22 : f32 to vector<16x256xf32>
    %44 = arith.maximumf %42, %43 : vector<16x256xf32>
    %45 = arith.truncf %44 : vector<16x256xf32> to vector<16x256xbf16>
    %c64 = arith.constant 64 : index
    %c0_23 = arith.constant 0 : index
    %46 = vector.load %arg2[%c64, %c0_23] : memref<96x128xbf16, #tpu.memory_space<vmem>>, vector<16x16xbf16>
    %c64_24 = arith.constant 64 : index
    %c0_25 = arith.constant 0 : index
    %47 = vector.load %arg3[%c64_24, %c0_25] : memref<96x1xf32, #tpu.memory_space<vmem>>, vector<16x1xf32>
    %cst_26 = arith.constant dense<0.000000e+00> : vector<16x256xf32>
    %48 = tpu.matmul %46, %39, %cst_26 {dimension_numbers = #tpu.dot_dimension_numbers<[1], [0], [0], [1], [0, 0, 1, 1], [], []>} : vector<16x16xbf16>, vector<16x256xbf16>, vector<16x256xf32> -> vector<16x256xf32>
    %49 = vector.broadcast %47 : vector<16x1xf32> to vector<16x256xf32>
    %50 = arith.addf %48, %49 : vector<16x256xf32>
    %cst_27 = arith.constant 0.000000e+00 : f32
    %51 = vector.broadcast %cst_27 : f32 to vector<16x256xf32>
    %52 = arith.maximumf %50, %51 : vector<16x256xf32>
    %53 = arith.truncf %52 : vector<16x256xf32> to vector<16x256xbf16>
    %cst_28 = arith.constant dense<0.000000e+00> : vector<16x256xf32>
    %54 = tpu.matmul %46, %45, %cst_28 {dimension_numbers = #tpu.dot_dimension_numbers<[1], [0], [0], [1], [0, 0, 1, 1], [], []>} : vector<16x16xbf16>, vector<16x256xbf16>, vector<16x256xf32> -> vector<16x256xf32>
    %55 = vector.broadcast %47 : vector<16x1xf32> to vector<16x256xf32>
    %56 = arith.addf %54, %55 : vector<16x256xf32>
    %cst_29 = arith.constant 0.000000e+00 : f32
    %57 = vector.broadcast %cst_29 : f32 to vector<16x256xf32>
    %58 = arith.maximumf %56, %57 : vector<16x256xf32>
    %59 = arith.truncf %58 : vector<16x256xf32> to vector<16x256xbf16>
    %c80 = arith.constant 80 : index
    %c0_30 = arith.constant 0 : index
    %60 = vector.load %arg2[%c80, %c0_30] : memref<96x128xbf16, #tpu.memory_space<vmem>>, vector<1x16xbf16>
    %c80_31 = arith.constant 80 : index
    %c0_32 = arith.constant 0 : index
    %61 = vector.load %arg3[%c80_31, %c0_32] : memref<96x1xf32, #tpu.memory_space<vmem>>, vector<1x1xf32>
    %cst_33 = arith.constant dense<0.000000e+00> : vector<1x256xf32>
    %62 = tpu.matmul %60, %53, %cst_33 {dimension_numbers = #tpu.dot_dimension_numbers<[1], [0], [0], [1], [0, 0, 1, 1], [], []>} : vector<1x16xbf16>, vector<16x256xbf16>, vector<1x256xf32> -> vector<1x256xf32>
    %63 = vector.broadcast %61 : vector<1x1xf32> to vector<1x256xf32>
    %64 = arith.addf %62, %63 : vector<1x256xf32>
    %cst_34 = arith.constant 0.000000e+00 : f32
    %65 = vector.broadcast %cst_34 : f32 to vector<1x256xf32>
    %66 = arith.maximumf %64, %65 : vector<1x256xf32>
    %cst_35 = arith.constant dense<0.000000e+00> : vector<1x256xf32>
    %67 = tpu.matmul %60, %59, %cst_35 {dimension_numbers = #tpu.dot_dimension_numbers<[1], [0], [0], [1], [0, 0, 1, 1], [], []>} : vector<1x16xbf16>, vector<16x256xbf16>, vector<1x256xf32> -> vector<1x256xf32>
    %68 = vector.broadcast %61 : vector<1x1xf32> to vector<1x256xf32>
    %69 = arith.addf %67, %68 : vector<1x256xf32>
    %cst_36 = arith.constant 0.000000e+00 : f32
    %70 = vector.broadcast %cst_36 : f32 to vector<1x256xf32>
    %71 = arith.maximumf %69, %70 : vector<1x256xf32>
    %c0_37 = arith.constant 0 : index
    %c0_38 = arith.constant 0 : index
    %72 = vector.load %arg4[%c0_37, %c0_38] : memref<1x512xf32, #tpu.memory_space<vmem>>, vector<1x256xf32>
    tpu.vector_store %arg4[%c0_37, %c0_38], %66 {strides = array<i32>} : memref<1x512xf32, #tpu.memory_space<vmem>>, vector<1x256xf32>,
    %c0_39 = arith.constant 0 : index
    %c256_40 = arith.constant 256 : index
    %73 = vector.load %arg4[%c0_39, %c256_40] : memref<1x512xf32, #tpu.memory_space<vmem>>, vector<1x256xf32>
    tpu.vector_store %arg4[%c0_39, %c256_40], %71 {strides = array<i32>} : memref<1x512xf32, #tpu.memory_space<vmem>>, vector<1x256xf32>,
    return
  }
  func.func @transform_0(%arg0: i32) -> (i32, i32) {
    %c0_i32 = arith.constant 0 : i32
    %c0_i32_0 = arith.constant 0 : i32
    return %c0_i32, %arg0 : i32, i32
  }
  func.func @transform_1(%arg0: i32) -> (i32, i32) {
    %c0_i32 = arith.constant 0 : i32
    %c0_i32_0 = arith.constant 0 : i32
    %c0_i32_1 = arith.constant 0 : i32
    return %c0_i32, %c0_i32_0 : i32, i32
  }
  func.func @transform_2(%arg0: i32) -> (i32, i32) {
    %c0_i32 = arith.constant 0 : i32
    %c0_i32_0 = arith.constant 0 : i32
    %c0_i32_1 = arith.constant 0 : i32
    return %c0_i32, %c0_i32_0 : i32, i32
  }
  func.func @transform_3(%arg0: i32) -> (i32, i32) {
    %c0_i32 = arith.constant 0 : i32
    %c0_i32_0 = arith.constant 0 : i32
    return %c0_i32, %arg0 : i32, i32
  }
}

</mosaic_0001>

<llo_original>
// kernel: forward.1
$region0: #{forward.1}
  #allocation0 [shape = 'u32[]', space=smem, size = 0x4, offset = 0x4, fixed_abs, tag = 'smem constant byte address 0x4 - core index']
  #allocation1 [shape = 'u32[144,128]{1,0:T(1,128)}', space=vmem, size = 0x12000, scoped, tag = 'internal scratch']
  %s0 = inlined_call_operand.vmem [shape: f32[16,512], index: 0, kind: input, shape index: {}]
  %s1 = inlined_call_operand.hbm [shape: bf16[96,128], index: 1, kind: input, shape index: {}]
  %s2 = inlined_call_operand.vmem [shape: f32[96,1], index: 2, kind: input, shape index: {}]
  %s3 = inlined_call_operand.hbm [shape: f32[1,512], index: 3, kind: output, shape index: {}]
  %s4 = sld [smem:[#allocation0]]
  $region26: #{forward.1} parent=0
    _
  %s6 = ssub.s32 1, %s4
  %s7 = scalar_select 0, %s6, %s4
  $region1: #{forward.1} parent=0
    #allocation2 [shape = 'u8[24576]{0}', space=vmem, size = 0x6000, scoped, tag = 'input window, operand 1, single buffered']
    #allocation3 [shape = 's32[1]{0}', space=sflag, size = 0x4, scoped, tag = 'scoped memory for forward.1']
    #allocation4 [shape = 's32[1]{0}', space=sflag, size = 0x4, scoped, tag = 'scoped memory for forward.1']
    #allocation5 [shape = 'u8[2048]{0}', space=vmem, size = 0x800, scoped, tag = 'output window, operand 0, single buffered']
    %8 = vsyncpa [#allocation3], 0
    %9 = vsyncpa [#allocation4], 0
    // Predicated region
    $region2: #{forward.1} parent=1 // pred_check
      _
    $region3: #{forward.1} parent=1 // pred_check_branch
      %11 = sbr.rel (0) target = $region5
    $region4: #{forward.1} parent=1 // pred_region
      _
    $region5: #{forward.1} parent=1 // pred_fallthru
      _
    // Predicated region
    $region6: #{forward.1} parent=1 // pred_check
      _
    $region7: #{forward.1} parent=1 // pred_check_branch
      %13 = sbr.rel (0) target = $region9
    $region8: #{forward.1} parent=1 // pred_region
      %s15 = ssub.s32 768, 768
      %16 = vsyncadd [#allocation3], %s15
      %s17 = sshll.u32 [#allocation2], 4
      %s18 = int_to_ptr.vmem [resolvable:$true] %s17
      %23 = dma.hbm_to_vmem [thread:$0]  %s1, 768, %s18, [#allocation3], 64, 64, 4
    $region9: #{forward.1} parent=1 // pred_fallthru
      _
    // Predicated region
    $region10: #{forward.1} parent=1 // pred_check
      _
    $region11: #{forward.1} parent=1 // pred_check_branch
      %25 = sbr.rel (0) target = $region13
    $region12: #{forward.1} parent=1 // pred_region
      _
    $region13: #{forward.1} parent=1 // pred_fallthru
      _
    // Predicated region
    $region14: #{forward.1} parent=1 // pred_check
      _
    $region15: #{forward.1} parent=1 // pred_check_branch
      %27 = sbr.rel (0) target = $region17
    $region16: #{forward.1} parent=1 // pred_region
      %28 = dma.done [#allocation3], 768
    $region17: #{forward.1} parent=1 // pred_fallthru
      _
    %v30 = vld [vmem:[%s0] sm:$0xff]
    %v31 = vld [vmem:[%s0 + $0x8] sm:$0xff]
    %v32 = vld [vmem:[%s0 + $0x20] sm:$0xff]
    %v33 = vld [vmem:[%s0 + $0x28] sm:$0xff]
    %v34 = vpack.c.bf16 %v32, %v30
    %v35 = vpack.c.bf16 %v33, %v31
    %v36 = vld [vmem:[%s0 + $0x10] sm:$0xff]
    %v37 = vld [vmem:[%s0 + $0x18] sm:$0xff]
    %v38 = vld [vmem:[%s0 + $0x30] sm:$0xff]
    %v39 = vld [vmem:[%s0 + $0x38] sm:$0xff]
    %v40 = vpack.c.bf16 %v38, %v36
    %v41 = vpack.c.bf16 %v39, %v37
    %v42 = vld [vmem:[#allocation2] sm:$0xf]
    %v43 = vld [vmem:[#allocation2 + $0x4] sm:$0xf]
    %v44 = vld [vmem:[#allocation2 + $0x8] sm:$0xf]
    %v45 = vld [vmem:[#allocation2 + $0xc] sm:$0xf]
    %v46 = vld [vmem:[%s2] sm:$0xff]
    %v47 = vld [vmem:[%s2 + $0x8] sm:$0xff]
    %v48 = vld [vmem:[%s2 + $0x10] sm:$0xff]
    %v49 = vld [vmem:[%s2 + $0x18] sm:$0xff]
    %51 = vset.pattern.permute.xlu0 0
    %52 = vperm.xlu0 %51, %v46
    %v53 = vpop.permute.xlu0 %52
    %56 = vset.pattern.permute.xlu0 0
    %57 = vperm.xlu0 %56, %v47
    %v58 = vpop.permute.xlu0 %57
    %61 = vset.pattern.permute.xlu0 0
    %62 = vperm.xlu0 %61, %v48
    %v63 = vpop.permute.xlu0 %62
    %66 = vset.pattern.permute.xlu0 0
    %67 = vperm.xlu0 %66, %v49
    %v68 = vpop.permute.xlu0 %67
    %v74 = vunpack.c.l.b16 %v42
    %v75 = vunpack.c.l.b16 %v43
    %v76 = vunpack.c.l.b16 %v44
    %v77 = vunpack.c.l.b16 %v45
    %v78 = vpack.c.b16 %v75, %v74
    %v79 = vpack.c.b16 %v77, %v76
    %vm80 = vcmask 130048
    %v82 = vsel %vm80, %v78, 0
    %v85 = vsel %vm80, %v79, 0
    %87 = vmatprep.subr.bf16.mxu0 0
    %88 = vmatpush1.bf16.msra.mxu0 0
    %89 = vmatprep.subr.bf16.mxu0 0
    %90 = vmatpush1.bf16.msra.mxu0 0
    %91 = vmatprep.subr.bf16.mxu0 0
    %92 = vmatpush1.bf16.msra.mxu0 0
    %93 = vmatprep.subr.bf16.mxu0 0
    %94 = vmatpush1.bf16.msra.mxu0 0
    %95 = vmatprep.subr.bf16.mxu0 0
    %96 = vmatpush1.bf16.msra.mxu0 0
    %97 = vmatprep.subr.bf16.mxu0 0
    %98 = vmatpush1.bf16.msra.mxu0 0
    %99 = vmatprep.subr.bf16.mxu0 0
    %100 = vmatpush1.bf16.msra.mxu0 0
    %101 = vmatprep.subr.bf16.mxu0 %v35
    %102 = vmatpush1.bf16.msra.mxu0 %v34
    %103 = vmatprep.subr.bf16.mxu0 0
    %104 = vmatpush2.bf16.msra.mxu0 0
    %105 = vmatprep.subr.bf16.mxu0 0
    %106 = vmatpush2.bf16.msra.mxu0 0
    %107 = vmatprep.subr.bf16.mxu0 0
    %108 = vmatpush2.bf16.msra.mxu0 0
    %109 = vmatprep.subr.bf16.mxu0 0
    %110 = vmatpush2.bf16.msra.mxu0 0
    %111 = vmatprep.subr.bf16.mxu0 0
    %112 = vmatpush2.bf16.msra.mxu0 0
    %113 = vmatprep.subr.bf16.mxu0 0
    %114 = vmatpush2.bf16.msra.mxu0 0
    %115 = vmatprep.subr.bf16.mxu0 0
    %116 = vmatpush2.bf16.msra.mxu0 0
    %117 = vmatprep.subr.bf16.mxu0 0
    %118 = vmatpush2.bf16.msra.mxu0 0
    %119 = vmatprep.mubr.bf16.mxu0 0
    %120 = vmatmul.mubr.bf16.gmra.mxu0 %v82
    %v121 = vpop.f32.mrf.mxu0
    %v122 = vadd.f32 %v53, %v121
    %v123 = vpop.f32.mrf.mxu0
    %v124 = vadd.f32 %v53, %v123
    %v125 = vpop.f32.mrf.mxu0
    %v126 = vadd.f32 %v58, %v125
    %v127 = vpop.f32.mrf.mxu0
    %v128 = vadd.f32 %v58, %v127
    %129 = vmatprep.mubr.bf16.mxu0 0
    %130 = vmatmul.mubr.bf16.gmra.mxu0 %v85
    %v131 = vpop.f32.mrf.mxu0
    %v132 = vadd.f32 %v63, %v131
    %v133 = vpop.f32.mrf.mxu0
    %v134 = vadd.f32 %v63, %v133
    %v135 = vpop.f32.mrf.mxu0
    %v136 = vadd.f32 %v68, %v135
    %v137 = vpop.f32.mrf.mxu0
    %v138 = vadd.f32 %v68, %v137
    %139 = vdwg.mxu0
    %v140 = vmax.f32 %v122, 0.0
    %v141 = vmax.f32 %v124, 0.0
    %v142 = vmax.f32 %v126, 0.0
    %v143 = vmax.f32 %v128, 0.0
    %v144 = vmax.f32 %v132, 0.0
    %v145 = vmax.f32 %v134, 0.0
    %v146 = vmax.f32 %v136, 0.0
    %v147 = vmax.f32 %v138, 0.0
    %v148 = vpack.c.bf16 %v142, %v140
    %v149 = vpack.c.bf16 %v143, %v141
    %v150 = vpack.c.bf16 %v146, %v144
    %v151 = vpack.c.bf16 %v147, %v145
    %152 = vmatprep.subr.bf16.mxu0 0
    %153 = vmatpush1.bf16.msra.mxu0 0
    %154 = vmatprep.subr.bf16.mxu0 0
    %155 = vmatpush1.bf16.msra.mxu0 0
    %156 = vmatprep.subr.bf16.mxu0 0
    %157 = vmatpush1.bf16.msra.mxu0 0
    %158 = vmatprep.subr.bf16.mxu0 0
    %159 = vmatpush1.bf16.msra.mxu0 0
    %160 = vmatprep.subr.bf16.mxu0 0
    %161 = vmatpush1.bf16.msra.mxu0 0
    %162 = vmatprep.subr.bf16.mxu0 0
    %163 = vmatpush1.bf16.msra.mxu0 0
    %164 = vmatprep.subr.bf16.mxu0 0
    %165 = vmatpush1.bf16.msra.mxu0 0
    %166 = vmatprep.subr.bf16.mxu0 %v41
    %167 = vmatpush1.bf16.msra.mxu0 %v40
    %168 = vmatprep.subr.bf16.mxu0 0
    %169 = vmatpush2.bf16.msra.mxu0 0
    %170 = vmatprep.subr.bf16.mxu0 0
    %171 = vmatpush2.bf16.msra.mxu0 0
    %172 = vmatprep.subr.bf16.mxu0 0
    %173 = vmatpush2.bf16.msra.mxu0 0
    %174 = vmatprep.subr.bf16.mxu0 0
    %175 = vmatpush2.bf16.msra.mxu0 0
    %176 = vmatprep.subr.bf16.mxu0 0
    %177 = vmatpush2.bf16.msra.mxu0 0
    %178 = vmatprep.subr.bf16.mxu0 0
    %179 = vmatpush2.bf16.msra.mxu0 0
    %180 = vmatprep.subr.bf16.mxu0 0
    %181 = vmatpush2.bf16.msra.mxu0 0
    %182 = vmatprep.subr.bf16.mxu0 0
    %183 = vmatpush2.bf16.msra.mxu0 0
    %184 = vmatprep.mubr.bf16.mxu0 0
    %185 = vmatmul.mubr.bf16.gmra.mxu0 %v82
    %v186 = vpop.f32.mrf.mxu0
    %v187 = vadd.f32 %v53, %v186
    %v188 = vpop.f32.mrf.mxu0
    %v189 = vadd.f32 %v53, %v188
    %v190 = vpop.f32.mrf.mxu0
    %v191 = vadd.f32 %v58, %v190
    %v192 = vpop.f32.mrf.mxu0
    %v193 = vadd.f32 %v58, %v192
    %194 = vmatprep.mubr.bf16.mxu0 0
    %195 = vmatmul.mubr.bf16.gmra.mxu0 %v85
    %v196 = vpop.f32.mrf.mxu0
    %v197 = vadd.f32 %v63, %v196
    %v198 = vpop.f32.mrf.mxu0
    %v199 = vadd.f32 %v63, %v198
    %v200 = vpop.f32.mrf.mxu0
    %v201 = vadd.f32 %v68, %v200
    %v202 = vpop.f32.mrf.mxu0
    %v203 = vadd.f32 %v68, %v202
    %204 = vdwg.mxu0
    %v205 = vmax.f32 %v187, 0.0
    %v206 = vmax.f32 %v189, 0.0
    %v207 = vmax.f32 %v191, 0.0
    %v208 = vmax.f32 %v193, 0.0
    %v209 = vmax.f32 %v197, 0.0
    %v210 = vmax.f32 %v199, 0.0
    %v211 = vmax.f32 %v201, 0.0
    %v212 = vmax.f32 %v203, 0.0
    %v213 = vpack.c.bf16 %v207, %v205
    %v214 = vpack.c.bf16 %v208, %v206
    %v215 = vpack.c.bf16 %v211, %v209
    %v216 = vpack.c.bf16 %v212, %v210
    %v217 = vld [vmem:[#allocation2 + $0x10] sm:$0xf]
    %v218 = vld [vmem:[#allocation2 + $0x14] sm:$0xf]
    %v219 = vld [vmem:[%s2 + $0x20] sm:$0xff]
    %v220 = vld [vmem:[%s2 + $0x28] sm:$0xff]
    %222 = vset.pattern.permute.xlu0 0
    %223 = vperm.xlu0 %222, %v219
    %v224 = vpop.permute.xlu0 %223
    %227 = vset.pattern.permute.xlu0 0
    %228 = vperm.xlu0 %227, %v220
    %v229 = vpop.permute.xlu0 %228
    %v233 = vunpack.c.l.b16 %v217
    %v234 = vunpack.c.l.b16 %v218
    %v235 = vpack.c.b16 %v234, %v233
    %vm236 = vcmask 261120
    %v238 = vsel %vm236, %v235, 0
    %240 = vmatprep.subr.bf16.mxu0 0
    %241 = vmatpush1.bf16.msra.mxu0 0
    %242 = vmatprep.subr.bf16.mxu0 0
    %243 = vmatpush1.bf16.msra.mxu0 0
    %244 = vmatprep.subr.bf16.mxu0 0
    %245 = vmatpush1.bf16.msra.mxu0 0
    %246 = vmatprep.subr.bf16.mxu0 0
    %247 = vmatpush1.bf16.msra.mxu0 0
    %248 = vmatprep.subr.bf16.mxu0 0
    %249 = vmatpush1.bf16.msra.mxu0 0
    %250 = vmatprep.subr.bf16.mxu0 0
    %251 = vmatpush1.bf16.msra.mxu0 0
    %252 = vmatprep.subr.bf16.mxu0 %v151
    %253 = vmatpush1.bf16.msra.mxu0 %v150
    %254 = vmatprep.subr.bf16.mxu0 %v149
    %255 = vmatpush1.bf16.msra.mxu0 %v148
    %256 = vmatprep.subr.bf16.mxu0 0
    %257 = vmatpush2.bf16.msra.mxu0 0
    %258 = vmatprep.subr.bf16.mxu0 0
    %259 = vmatpush2.bf16.msra.mxu0 0
    %260 = vmatprep.subr.bf16.mxu0 0
    %261 = vmatpush2.bf16.msra.mxu0 0
    %262 = vmatprep.subr.bf16.mxu0 0
    %263 = vmatpush2.bf16.msra.mxu0 0
    %264 = vmatprep.subr.bf16.mxu0 0
    %265 = vmatpush2.bf16.msra.mxu0 0
    %266 = vmatprep.subr.bf16.mxu0 0
    %267 = vmatpush2.bf16.msra.mxu0 0
    %268 = vmatprep.subr.bf16.mxu0 0
    %269 = vmatpush2.bf16.msra.mxu0 0
    %270 = vmatprep.subr.bf16.mxu0 0
    %271 = vmatpush2.bf16.msra.mxu0 0
    %272 = vmatprep.mubr.bf16.mxu0 0
    %273 = vmatmul.mubr.bf16.gmra.mxu0 %v238
    %v274 = vpop.f32.mrf.mxu0
    %v275 = vadd.f32 %v224, %v274
    %v276 = vpop.f32.mrf.mxu0
    %v277 = vadd.f32 %v224, %v276
    %v278 = vpop.f32.mrf.mxu0
    %v279 = vadd.f32 %v229, %v278
    %v280 = vpop.f32.mrf.mxu0
    %v281 = vadd.f32 %v229, %v280
    %282 = vdwg.mxu0
    %v283 = vmax.f32 %v275, 0.0
    %v284 = vmax.f32 %v277, 0.0
    %v285 = vmax.f32 %v279, 0.0
    %v286 = vmax.f32 %v281, 0.0
    %v287 = vpack.c.bf16 %v285, %v283
    %v288 = vpack.c.bf16 %v286, %v284
    %289 = vmatprep.subr.bf16.mxu0 0
    %290 = vmatpush1.bf16.msra.mxu0 0
    %291 = vmatprep.subr.bf16.mxu0 0
    %292 = vmatpush1.bf16.msra.mxu0 0
    %293 = vmatprep.subr.bf16.mxu0 0
    %294 = vmatpush1.bf16.msra.mxu0 0
    %295 = vmatprep.subr.bf16.mxu0 0
    %296 = vmatpush1.bf16.msra.mxu0 0
    %297 = vmatprep.subr.bf16.mxu0 0
    %298 = vmatpush1.bf16.msra.mxu0 0
    %299 = vmatprep.subr.bf16.mxu0 0
    %300 = vmatpush1.bf16.msra.mxu0 0
    %301 = vmatprep.subr.bf16.mxu0 %v216
    %302 = vmatpush1.bf16.msra.mxu0 %v215
    %303 = vmatprep.subr.bf16.mxu0 %v214
    %304 = vmatpush1.bf16.msra.mxu0 %v213
    %305 = vmatprep.subr.bf16.mxu0 0
    %306 = vmatpush2.bf16.msra.mxu0 0
    %307 = vmatprep.subr.bf16.mxu0 0
    %308 = vmatpush2.bf16.msra.mxu0 0
    %309 = vmatprep.subr.bf16.mxu0 0
    %310 = vmatpush2.bf16.msra.mxu0 0
    %311 = vmatprep.subr.bf16.mxu0 0
    %312 = vmatpush2.bf16.msra.mxu0 0
    %313 = vmatprep.subr.bf16.mxu0 0
    %314 = vmatpush2.bf16.msra.mxu0 0
    %315 = vmatprep.subr.bf16.mxu0 0
    %316 = vmatpush2.bf16.msra.mxu0 0
    %317 = vmatprep.subr.bf16.mxu0 0
    %318 = vmatpush2.bf16.msra.mxu0 0
    %319 = vmatprep.subr.bf16.mxu0 0
    %320 = vmatpush2.bf16.msra.mxu0 0
    %321 = vmatprep.mubr.bf16.mxu0 0
    %322 = vmatmul.mubr.bf16.gmra.mxu0 %v238
    %v323 = vpop.f32.mrf.mxu0
    %v324 = vadd.f32 %v224, %v323
    %v325 = vpop.f32.mrf.mxu0
    %v326 = vadd.f32 %v224, %v325
    %v327 = vpop.f32.mrf.mxu0
    %v328 = vadd.f32 %v229, %v327
    %v329 = vpop.f32.mrf.mxu0
    %v330 = vadd.f32 %v229, %v329
    %331 = vdwg.mxu0
    %v332 = vmax.f32 %v324, 0.0
    %v333 = vmax.f32 %v326, 0.0
    %v334 = vmax.f32 %v328, 0.0
    %v335 = vmax.f32 %v330, 0.0
    %v336 = vpack.c.bf16 %v334, %v332
    %v337 = vpack.c.bf16 %v335, %v333
    %v338 = vld [vmem:[#allocation2 + $0x18] sm:$0xf]
    %v339 = vld [vmem:[#allocation2 + $0x1c] sm:$0xf]
    %v340 = vld [vmem:[%s2 + $0x30] sm:$0xff]
    %v341 = vld [vmem:[%s2 + $0x38] sm:$0xff]
    %343 = vset.pattern.permute.xlu0 0
    %344 = vperm.xlu0 %343, %v340
    %v345 = vpop.permute.xlu0 %344
    %348 = vset.pattern.permute.xlu0 0
    %349 = vperm.xlu0 %348, %v341
    %v350 = vpop.permute.xlu0 %349
    %v354 = vunpack.c.l.b16 %v338
    %v355 = vunpack.c.l.b16 %v339
    %v356 = vpack.c.b16 %v355, %v354
    %v358 = vsel %vm80, %v356, 0
    %360 = vmatprep.subr.bf16.mxu0 0
    %361 = vmatpush1.bf16.msra.mxu0 0
    %362 = vmatprep.subr.bf16.mxu0 0
    %363 = vmatpush1.bf16.msra.mxu0 0
    %364 = vmatprep.subr.bf16.mxu0 0
    %365 = vmatpush1.bf16.msra.mxu0 0
    %366 = vmatprep.subr.bf16.mxu0 0
    %367 = vmatpush1.bf16.msra.mxu0 0
    %368 = vmatprep.subr.bf16.mxu0 0
    %369 = vmatpush1.bf16.msra.mxu0 0
    %370 = vmatprep.subr.bf16.mxu0 0
    %371 = vmatpush1.bf16.msra.mxu0 0
    %372 = vmatprep.subr.bf16.mxu0 0
    %373 = vmatpush1.bf16.msra.mxu0 0
    %374 = vmatprep.subr.bf16.mxu0 %v288
    %375 = vmatpush1.bf16.msra.mxu0 %v287
    %376 = vmatprep.subr.bf16.mxu0 0
    %377 = vmatpush2.bf16.msra.mxu0 0
    %378 = vmatprep.subr.bf16.mxu0 0
    %379 = vmatpush2.bf16.msra.mxu0 0
    %380 = vmatprep.subr.bf16.mxu0 0
    %381 = vmatpush2.bf16.msra.mxu0 0
    %382 = vmatprep.subr.bf16.mxu0 0
    %383 = vmatpush2.bf16.msra.mxu0 0
    %384 = vmatprep.subr.bf16.mxu0 0
    %385 = vmatpush2.bf16.msra.mxu0 0
    %386 = vmatprep.subr.bf16.mxu0 0
    %387 = vmatpush2.bf16.msra.mxu0 0
    %388 = vmatprep.subr.bf16.mxu0 0
    %389 = vmatpush2.bf16.msra.mxu0 0
    %390 = vmatprep.subr.bf16.mxu0 0
    %391 = vmatpush2.bf16.msra.mxu0 0
    %392 = vmatprep.mubr.bf16.mxu0 0
    %393 = vmatmul.mubr.bf16.gmra.mxu0 %v358
    %v394 = vpop.f32.mrf.mxu0
    %v395 = vadd.f32 %v345, %v394
    %v396 = vpop.f32.mrf.mxu0
    %v397 = vadd.f32 %v345, %v396
    %v398 = vpop.f32.mrf.mxu0
    %v399 = vadd.f32 %v350, %v398
    %v400 = vpop.f32.mrf.mxu0
    %v401 = vadd.f32 %v350, %v400
    %402 = vdwg.mxu0
    %v403 = vmax.f32 %v395, 0.0
    %v404 = vmax.f32 %v397, 0.0
    %v405 = vmax.f32 %v399, 0.0
    %v406 = vmax.f32 %v401, 0.0
    %v407 = vpack.c.bf16 %v405, %v403
    %v408 = vpack.c.bf16 %v406, %v404
    %409 = vmatprep.subr.bf16.mxu0 0
    %410 = vmatpush1.bf16.msra.mxu0 0
    %411 = vmatprep.subr.bf16.mxu0 0
    %412 = vmatpush1.bf16.msra.mxu0 0
    %413 = vmatprep.subr.bf16.mxu0 0
    %414 = vmatpush1.bf16.msra.mxu0 0
    %415 = vmatprep.subr.bf16.mxu0 0
    %416 = vmatpush1.bf16.msra.mxu0 0
    %417 = vmatprep.subr.bf16.mxu0 0
    %418 = vmatpush1.bf16.msra.mxu0 0
    %419 = vmatprep.subr.bf16.mxu0 0
    %420 = vmatpush1.bf16.msra.mxu0 0
    %421 = vmatprep.subr.bf16.mxu0 0
    %422 = vmatpush1.bf16.msra.mxu0 0
    %423 = vmatprep.subr.bf16.mxu0 %v337
    %424 = vmatpush1.bf16.msra.mxu0 %v336
    %425 = vmatprep.subr.bf16.mxu0 0
    %426 = vmatpush2.bf16.msra.mxu0 0
    %427 = vmatprep.subr.bf16.mxu0 0
    %428 = vmatpush2.bf16.msra.mxu0 0
    %429 = vmatprep.subr.bf16.mxu0 0
    %430 = vmatpush2.bf16.msra.mxu0 0
    %431 = vmatprep.subr.bf16.mxu0 0
    %432 = vmatpush2.bf16.msra.mxu0 0
    %433 = vmatprep.subr.bf16.mxu0 0
    %434 = vmatpush2.bf16.msra.mxu0 0
    %435 = vmatprep.subr.bf16.mxu0 0
    %436 = vmatpush2.bf16.msra.mxu0 0
    %437 = vmatprep.subr.bf16.mxu0 0
    %438 = vmatpush2.bf16.msra.mxu0 0
    %439 = vmatprep.subr.bf16.mxu0 0
    %440 = vmatpush2.bf16.msra.mxu0 0
    %441 = vmatprep.mubr.bf16.mxu0 0
    %442 = vmatmul.mubr.bf16.gmra.mxu0 %v358
    %v443 = vpop.f32.mrf.mxu0
    %v444 = vadd.f32 %v345, %v443
    %v445 = vpop.f32.mrf.mxu0
    %v446 = vadd.f32 %v345, %v445
    %v447 = vpop.f32.mrf.mxu0
    %v448 = vadd.f32 %v350, %v447
    %v449 = vpop.f32.mrf.mxu0
    %v450 = vadd.f32 %v350, %v449
    %451 = vdwg.mxu0
    %v452 = vmax.f32 %v444, 0.0
    %v453 = vmax.f32 %v446, 0.0
    %v454 = vmax.f32 %v448, 0.0
    %v455 = vmax.f32 %v450, 0.0
    %v456 = vpack.c.bf16 %v454, %v452
    %v457 = vpack.c.bf16 %v455, %v453
    %v458 = vld [vmem:[#allocation2 + $0x20] sm:$0xf]
    %v459 = vld [vmem:[#allocation2 + $0x24] sm:$0xf]
    %v460 = vld [vmem:[%s2 + $0x40] sm:$0xff]
    %v461 = vld [vmem:[%s2 + $0x48] sm:$0xff]
    %463 = vset.pattern.permute.xlu0 0
    %464 = vperm.xlu0 %463, %v460
    %v465 = vpop.permute.xlu0 %464
    %468 = vset.pattern.permute.xlu0 0
    %469 = vperm.xlu0 %468, %v461
    %v470 = vpop.permute.xlu0 %469
    %v474 = vunpack.c.l.b16 %v458
    %v475 = vunpack.c.l.b16 %v459
    %v476 = vpack.c.b16 %v475, %v474
    %v478 = vsel %vm80, %v476, 0
    %480 = vmatprep.subr.bf16.mxu0 0
    %481 = vmatpush1.bf16.msra.mxu0 0
    %482 = vmatprep.subr.bf16.mxu0 0
    %483 = vmatpush1.bf16.msra.mxu0 0
    %484 = vmatprep.subr.bf16.mxu0 0
    %485 = vmatpush1.bf16.msra.mxu0 0
    %486 = vmatprep.subr.bf16.mxu0 0
    %487 = vmatpush1.bf16.msra.mxu0 0
    %488 = vmatprep.subr.bf16.mxu0 0
    %489 = vmatpush1.bf16.msra.mxu0 0
    %490 = vmatprep.subr.bf16.mxu0 0
    %491 = vmatpush1.bf16.msra.mxu0 0
    %492 = vmatprep.subr.bf16.mxu0 0
    %493 = vmatpush1.bf16.msra.mxu0 0
    %494 = vmatprep.subr.bf16.mxu0 %v408
    %495 = vmatpush1.bf16.msra.mxu0 %v407
    %496 = vmatprep.subr.bf16.mxu0 0
    %497 = vmatpush2.bf16.msra.mxu0 0
    %498 = vmatprep.subr.bf16.mxu0 0
    %499 = vmatpush2.bf16.msra.mxu0 0
    %500 = vmatprep.subr.bf16.mxu0 0
    %501 = vmatpush2.bf16.msra.mxu0 0
    %502 = vmatprep.subr.bf16.mxu0 0
    %503 = vmatpush2.bf16.msra.mxu0 0
    %504 = vmatprep.subr.bf16.mxu0 0
    %505 = vmatpush2.bf16.msra.mxu0 0
    %506 = vmatprep.subr.bf16.mxu0 0
    %507 = vmatpush2.bf16.msra.mxu0 0
    %508 = vmatprep.subr.bf16.mxu0 0
    %509 = vmatpush2.bf16.msra.mxu0 0
    %510 = vmatprep.subr.bf16.mxu0 0
    %511 = vmatpush2.bf16.msra.mxu0 0
    %512 = vmatprep.mubr.bf16.mxu0 0
    %513 = vmatmul.mubr.bf16.gmra.mxu0 %v478
    %v514 = vpop.f32.mrf.mxu0
    %v515 = vadd.f32 %v465, %v514
    %v516 = vpop.f32.mrf.mxu0
    %v517 = vadd.f32 %v465, %v516
    %v518 = vpop.f32.mrf.mxu0
    %v519 = vadd.f32 %v470, %v518
    %v520 = vpop.f32.mrf.mxu0
    %v521 = vadd.f32 %v470, %v520
    %522 = vdwg.mxu0
    %v523 = vmax.f32 %v515, 0.0
    %v524 = vmax.f32 %v517, 0.0
    %v525 = vmax.f32 %v519, 0.0
    %v526 = vmax.f32 %v521, 0.0
    %v527 = vpack.c.bf16 %v525, %v523
    %v528 = vpack.c.bf16 %v526, %v524
    %529 = vmatprep.subr.bf16.mxu0 0
    %530 = vmatpush1.bf16.msra.mxu0 0
    %531 = vmatprep.subr.bf16.mxu0 0
    %532 = vmatpush1.bf16.msra.mxu0 0
    %533 = vmatprep.subr.bf16.mxu0 0
    %534 = vmatpush1.bf16.msra.mxu0 0
    %535 = vmatprep.subr.bf16.mxu0 0
    %536 = vmatpush1.bf16.msra.mxu0 0
    %537 = vmatprep.subr.bf16.mxu0 0
    %538 = vmatpush1.bf16.msra.mxu0 0
    %539 = vmatprep.subr.bf16.mxu0 0
    %540 = vmatpush1.bf16.msra.mxu0 0
    %541 = vmatprep.subr.bf16.mxu0 0
    %542 = vmatpush1.bf16.msra.mxu0 0
    %543 = vmatprep.subr.bf16.mxu0 %v457
    %544 = vmatpush1.bf16.msra.mxu0 %v456
    %545 = vmatprep.subr.bf16.mxu0 0
    %546 = vmatpush2.bf16.msra.mxu0 0
    %547 = vmatprep.subr.bf16.mxu0 0
    %548 = vmatpush2.bf16.msra.mxu0 0
    %549 = vmatprep.subr.bf16.mxu0 0
    %550 = vmatpush2.bf16.msra.mxu0 0
    %551 = vmatprep.subr.bf16.mxu0 0
    %552 = vmatpush2.bf16.msra.mxu0 0
    %553 = vmatprep.subr.bf16.mxu0 0
    %554 = vmatpush2.bf16.msra.mxu0 0
    %555 = vmatprep.subr.bf16.mxu0 0
    %556 = vmatpush2.bf16.msra.mxu0 0
    %557 = vmatprep.subr.bf16.mxu0 0
    %558 = vmatpush2.bf16.msra.mxu0 0
    %559 = vmatprep.subr.bf16.mxu0 0
    %560 = vmatpush2.bf16.msra.mxu0 0
    %561 = vmatprep.mubr.bf16.mxu0 0
    %562 = vmatmul.mubr.bf16.gmra.mxu0 %v478
    %v563 = vpop.f32.mrf.mxu0
    %v564 = vadd.f32 %v465, %v563
    %v565 = vpop.f32.mrf.mxu0
    %v566 = vadd.f32 %v465, %v565
    %v567 = vpop.f32.mrf.mxu0
    %v568 = vadd.f32 %v470, %v567
    %v569 = vpop.f32.mrf.mxu0
    %v570 = vadd.f32 %v470, %v569
    %571 = vdwg.mxu0
    %v572 = vmax.f32 %v564, 0.0
    %v573 = vmax.f32 %v566, 0.0
    %v574 = vmax.f32 %v568, 0.0
    %v575 = vmax.f32 %v570, 0.0
    %v576 = vpack.c.bf16 %v574, %v572
    %v577 = vpack.c.bf16 %v575, %v573
    %v578 = vld [vmem:[#allocation2 + $0x28] sm:$0x1]
    %v579 = vld [vmem:[%s2 + $0x50] sm:$0x1]
    %581 = vset.pattern.permute.xlu0 0
    %582 = vperm.xlu0 %581, %v579
    %v583 = vpop.permute.xlu0 %582
    %v586 = vsel %vm80, %v578, 0
    %588 = vmatprep.subr.bf16.mxu0 0
    %589 = vmatpush1.bf16.msra.mxu0 0
    %590 = vmatprep.subr.bf16.mxu0 0
    %591 = vmatpush1.bf16.msra.mxu0 0
    %592 = vmatprep.subr.bf16.mxu0 0
    %593 = vmatpush1.bf16.msra.mxu0 0
    %594 = vmatprep.subr.bf16.mxu0 0
    %595 = vmatpush1.bf16.msra.mxu0 0
    %596 = vmatprep.subr.bf16.mxu0 0
    %597 = vmatpush1.bf16.msra.mxu0 0
    %598 = vmatprep.subr.bf16.mxu0 0
    %599 = vmatpush1.bf16.msra.mxu0 0
    %600 = vmatprep.subr.bf16.mxu0 0
    %601 = vmatpush1.bf16.msra.mxu0 0
    %602 = vmatprep.subr.bf16.mxu0 %v528
    %603 = vmatpush1.bf16.msra.mxu0 %v527
    %604 = vmatprep.subr.bf16.mxu0 0
    %605 = vmatpush2.bf16.msra.mxu0 0
    %606 = vmatprep.subr.bf16.mxu0 0
    %607 = vmatpush2.bf16.msra.mxu0 0
    %608 = vmatprep.subr.bf16.mxu0 0
    %609 = vmatpush2.bf16.msra.mxu0 0
    %610 = vmatprep.subr.bf16.mxu0 0
    %611 = vmatpush2.bf16.msra.mxu0 0
    %612 = vmatprep.subr.bf16.mxu0 0
    %613 = vmatpush2.bf16.msra.mxu0 0
    %614 = vmatprep.subr.bf16.mxu0 0
    %615 = vmatpush2.bf16.msra.mxu0 0
    %616 = vmatprep.subr.bf16.mxu0 0
    %617 = vmatpush2.bf16.msra.mxu0 0
    %618 = vmatprep.subr.bf16.mxu0 0
    %619 = vmatpush2.bf16.msra.mxu0 0
    %620 = vmatprep.mubr.bf16.mxu0 0
    %621 = vmatmul.mubr.bf16.gmra.mxu0 %v586
    %v622 = vpop.f32.mrf.mxu0
    %v623 = vadd.f32 %v583, %v622
    %v624 = vpop.f32.mrf.mxu0
    %v625 = vadd.f32 %v583, %v624
    %v626 = vpop.f32.mrf.mxu0
    %v627 = vpop.f32.mrf.mxu0
    %628 = vdwg.mxu0
    %v629 = vmax.f32 %v623, 0.0
    %v630 = vmax.f32 %v625, 0.0
    %631 = vmatprep.subr.bf16.mxu0 0
    %632 = vmatpush1.bf16.msra.mxu0 0
    %633 = vmatprep.subr.bf16.mxu0 0
    %634 = vmatpush1.bf16.msra.mxu0 0
    %635 = vmatprep.subr.bf16.mxu0 0
    %636 = vmatpush1.bf16.msra.mxu0 0
    %637 = vmatprep.subr.bf16.mxu0 0
    %638 = vmatpush1.bf16.msra.mxu0 0
    %639 = vmatprep.subr.bf16.mxu0 0
    %640 = vmatpush1.bf16.msra.mxu0 0
    %641 = vmatprep.subr.bf16.mxu0 0
    %642 = vmatpush1.bf16.msra.mxu0 0
    %643 = vmatprep.subr.bf16.mxu0 0
    %644 = vmatpush1.bf16.msra.mxu0 0
    %645 = vmatprep.subr.bf16.mxu0 %v577
    %646 = vmatpush1.bf16.msra.mxu0 %v576
    %647 = vmatprep.subr.bf16.mxu0 0
    %648 = vmatpush2.bf16.msra.mxu0 0
    %649 = vmatprep.subr.bf16.mxu0 0
    %650 = vmatpush2.bf16.msra.mxu0 0
    %651 = vmatprep.subr.bf16.mxu0 0
    %652 = vmatpush2.bf16.msra.mxu0 0
    %653 = vmatprep.subr.bf16.mxu0 0
    %654 = vmatpush2.bf16.msra.mxu0 0
    %655 = vmatprep.subr.bf16.mxu0 0
    %656 = vmatpush2.bf16.msra.mxu0 0
    %657 = vmatprep.subr.bf16.mxu0 0
    %658 = vmatpush2.bf16.msra.mxu0 0
    %659 = vmatprep.subr.bf16.mxu0 0
    %660 = vmatpush2.bf16.msra.mxu0 0
    %661 = vmatprep.subr.bf16.mxu0 0
    %662 = vmatpush2.bf16.msra.mxu0 0
    %663 = vmatprep.mubr.bf16.mxu0 0
    %664 = vmatmul.mubr.bf16.gmra.mxu0 %v586
    %v665 = vpop.f32.mrf.mxu0
    %v666 = vadd.f32 %v583, %v665
    %v667 = vpop.f32.mrf.mxu0
    %v668 = vadd.f32 %v583, %v667
    %v669 = vpop.f32.mrf.mxu0
    %v670 = vpop.f32.mrf.mxu0
    %671 = vdwg.mxu0
    %v672 = vmax.f32 %v666, 0.0
    %v673 = vmax.f32 %v668, 0.0
    %v676 = vcombine.low %v629, %v630
    %v678 = vunpack.c.l.s4 1966171168
    %v679 = vunpack.c.0.s8 %v678
    %v680 = vlaneseq
    %v681 = vshrl.u32 %v680, 7
    %v682 = vsub.s32 %v679, %v681
    %v683 = vrot.slane %v676, %v682
    %v685 = vunpack.c.l.s4 1966171168
    %v686 = vunpack.c.0.s8 %v685
    %v687 = vlaneseq
    %v688 = vshrl.u32 %v687, 7
    %v689 = vsub.s32 %v686, %v688
    %v690 = vrot.slane %v683, %v689
    %v692 = vlaneseq
    %vm693 = vcmp.ge.s32.totalorder %v692, 0
    %vm694 = vcmp.lt.s32.totalorder %v692, 256
    %vm695 = vmand %vm693, %vm694
    %696 = vst.msk [vmem:[#allocation5] sm:$0x3] %vm695, %v690
    %v699 = vcombine.low %v672, %v673
    %v701 = vunpack.c.l.s4 1966171168
    %v702 = vunpack.c.0.s8 %v701
    %v703 = vlaneseq
    %v704 = vshrl.u32 %v703, 7
    %v705 = vsub.s32 %v702, %v704
    %v706 = vrot.slane %v699, %v705
    %v708 = vunpack.c.l.s4 1966171168
    %v709 = vunpack.c.0.s8 %v708
    %v710 = vlaneseq
    %v711 = vshrl.u32 %v710, 7
    %v712 = vsub.s32 %v709, %v711
    %v713 = vrot.slane %v706, %v712
    %715 = vst.msk [vmem:[#allocation5 + $0x2] sm:$0x3] %vm695, %v713
    // Predicated region
    $region18: #{forward.1} parent=1 // pred_check
      _
    $region19: #{forward.1} parent=1 // pred_check_branch
      %717 = sbr.rel (0) target = $region21
    $region20: #{forward.1} parent=1 // pred_region
      %s719 = ssub.s32 64, 64
      %720 = vsyncadd [#allocation4], %s719
      %s722 = sshll.u32 [#allocation5], 4
      %s723 = int_to_ptr.vmem [resolvable:$true] %s722
      %725 = dma.vmem_to_hbm [thread:$0]  %s723, 64, %s3, [#allocation4]
    $region21: #{forward.1} parent=1 // pred_fallthru
      _
    // Predicated region
    $region22: #{forward.1} parent=1 // pred_check
      _
    $region23: #{forward.1} parent=1 // pred_check_branch
      %727 = sbr.rel (0) target = $region25
    $region24: #{forward.1} parent=1 // pred_region
      %728 = dma.done [#allocation4], 64
    $region25: #{forward.1} parent=1 // pred_fallthru
      _
    %729 = vsyncpa [#allocation3], 1
    %730 = vsyncpa [#allocation4], 1

</llo_original>
